<compile_context>
chip_gen: v7x
topology: tpu7x:2x2x1
jax: 0.10.0
libtpu: 0.0.40
codegen_flags: <defaults>
</compile_context>

<pallas_src>
import jax
import jax.numpy as jnp
import numpy as np
from jax.experimental import pallas as pl
from jax.experimental.pallas import tpu as pltpu

LANE = 128            # TPU lane width
MAX_TILE_ROWS = 2048  # 2048*128*4B = 1 MiB per f32 input block; 2 inputs x 2
                      # buffers + tiny scratch/output stays far under the scoped
                      # VMEM defaults on v5e/v6e/v7x.


def _round_up(x, m):
    return (x + m - 1) // m * m


# ---------------------------------------------------------------------------
# Fused kernel:
#   d      = x * (g-1) + noise * (sigma*g)          (elementwise, VPU only)
#   loss_b = (w_b / N) * sum(d^2)                   (single-vreg accumulator)
# ---------------------------------------------------------------------------
def _fused_loss_kernel(sc_ref, x_ref, n_ref, o_ref, acc_ref):
    # sc_ref : (B, 3) f32 SMEM  -> [g-1, sigma*g, w/N]   (scalar prefetch)
    # x_ref  : (tile_rows, 128) input block
    # n_ref  : (tile_rows, 128) noise block
    # o_ref  : (8, 128) per-batch output block
    # acc_ref: (8, 128) f32 single-vreg scratch accumulator
    b = pl.program_id(0)
    k = pl.program_id(1)

    @pl.when(k == 0)
    def _init():
        acc_ref[...] = jnp.zeros_like(acc_ref)

    ca = sc_ref[b, 0]          # g - 1
    cb = sc_ref[b, 1]          # sigma * g
    x = x_ref[...].astype(jnp.float32)
    n = n_ref[...].astype(jnp.float32)
    d = x * ca + n * cb
    # Fold the tile rows onto 8 sublanes before touching the accumulator:
    # same VALU add count, but only one vreg of scratch read-modify-write per
    # step (relieves the vld/vst slot pressure of a full-tile accumulator).
    acc_ref[...] += jnp.sum((d * d).reshape(-1, 8, LANE), axis=0)

    @pl.when(k == pl.num_programs(1) - 1)
    def _finalize():
        loss_b = sc_ref[b, 2] * jnp.sum(acc_ref[...])   # one XLU reduce / batch
        o_ref[...] = jnp.broadcast_to(loss_b, (8, LANE))


def _fused_loss_pallas(x3, n3, scal_b3, *, tile_rows):
    B, R, _ = x3.shape
    K = R // tile_rows
    tens = lambda b, k, s: (b, k, 0)
    out = pl.pallas_call(
        _fused_loss_kernel,
        out_shape=jax.ShapeDtypeStruct((B, 8, LANE), jnp.float32),
        grid_spec=pltpu.PrefetchScalarGridSpec(
            num_scalar_prefetch=1,
            grid=(B, K),
            in_specs=[
                pl.BlockSpec((None, tile_rows, LANE), tens),
                pl.BlockSpec((None, tile_rows, LANE), tens),
            ],
            out_specs=pl.BlockSpec((None, 8, LANE), lambda b, k, s: (b, 0, 0)),
            scratch_shapes=[pltpu.VMEM((8, LANE), jnp.float32)],
        ),
        # B parallel (megacore on v7x), reduction axis K last and arbitrary.
        # Note: if B could be 1 with large K, split K into a leading parallel
        # axis of per-core partial sums to keep both v7x TCs busy.
        compiler_params=pltpu.CompilerParams(
            dimension_semantics=("parallel", "arbitrary")),
    )(scal_b3, x3, n3)
    return out[:, 0, 0]


# ---------------------------------------------------------------------------
# StandardDiffusionLoss._forward (loss_type='l2', offset_noise_level=0.0)
# ---------------------------------------------------------------------------
def standard_diffusion_loss(input_nchw, noise_nchw, sigmas, w, sigma_data=0.5):
    B = input_nchw.shape[0]
    N = int(np.prod(input_nchw.shape[1:]))

    # Lane/sublane-dense (B, R, 128) view; pad only when strictly needed.
    R = pl.cdiv(N, LANE)
    num_k = pl.cdiv(R, MAX_TILE_ROWS)
    tile_rows = _round_up(pl.cdiv(R, num_k), 8)
    R_pad = tile_rows * num_k
    N_pad = R_pad * LANE

    def to_tiles(a):
        a2 = a.reshape(B, N)
        if N_pad != N:
            # Zero padding in BOTH x and noise keeps d == 0 on the pad tail,
            # so the (w/N) * sum is unaffected.  Typical latent shapes
            # (N % 1024 == 0) take the copy-free branch.
            a2 = jnp.pad(a2, ((0, 0), (0, N_pad - N)))
        return a2.reshape(B, R_pad, LANE)

    x3 = to_tiles(input_nchw)
    n3 = to_tiles(noise_nchw)

    sig = sigmas.astype(jnp.float32)
    w32 = w.astype(jnp.float32)
    sd = jnp.float32(sigma_data)
    sd2 = sd * sd

    # EDM preconditioning scalars (per-batch, cheap plain-JAX glue).
    c_skip = sd2 / (sig**2 + sd2)
    c_out = sig * sd / jnp.sqrt(sig**2 + sd2)
    c_in = 1.0 / jnp.sqrt(sig**2 + sd2)

    # TODO(synk): `network`/`denoiser` are external nn.Modules in the original
    # forward(); with the identity network stand-in (net_out = c_in * noised)
    # the whole pipeline collapses algebraically into the single fused kernel
    # above.  With a real network, split back into: kernel 1 emitting
    # c_in*(x + noise*sigma) as the network input, then the fused epilogue
    # kernel recomputing `noised` from x/noise/sigma in SMEM.
    g = c_in * c_out + c_skip
    ca = g - 1.0                       # coefficient on x
    cb = sig * g                       # coefficient on noise
    w_over_n = w32 / jnp.float32(N)    # fold mean + loss weighting into one scalar

    scal_b3 = jnp.stack([ca, cb, w_over_n], axis=1)   # (B, 3) f32 -> SMEM

    return _fused_loss_pallas(x3, n3, scal_b3, tile_rows=tile_rows)


# ---------------------------------------------------------------------------
if __name__ == "__main__":
    key = jax.random.PRNGKey(0)
    B, C, H, W = 2, 4, 16, 16
    k1, k2, k3 = jax.random.split(key, 3)

    x = jax.random.normal(k1, (B, C, H, W), jnp.float32)

    # sigma_sampler = EDMSampling(p_mean=-1.2, p_std=1.2)
    p_mean, p_std, sigma_data = -1.2, 1.2, 0.5
    sigmas = jnp.exp(p_mean + p_std * jax.random.normal(k2, (B,), jnp.float32))

    # noise = torch.randn_like(input); offset_noise_level == 0.0 -> no offset term
    noise = jax.random.normal(k3, (B, C, H, W), jnp.float32)

    # loss_weighting = EDMWeighting(sigma_data=0.5)
    w = (sigmas**2 + sigma_data**2) / (sigmas * sigma_data) ** 2

    loss_fn = jax.jit(standard_diffusion_loss)
    loss = jax.block_until_ready(loss_fn(x, noise, sigmas, w, sigma_data))

    # Pure-JAX reference for correctness (mirrors the PyTorch module).
    sig_bc = sigmas[:, None, None, None]
    noised_ref = x + noise * sig_bc
    c_skip_r = sigma_data**2 / (sig_bc**2 + sigma_data**2)
    c_out_r = sig_bc * sigma_data / jnp.sqrt(sig_bc**2 + sigma_data**2)
    c_in_r = 1.0 / jnp.sqrt(sig_bc**2 + sigma_data**2)
    model_ref = (noised_ref * c_in_r) * c_out_r + noised_ref * c_skip_r
    loss_ref = jnp.mean(
        (w[:, None, None, None] * (model_ref - x) ** 2).reshape(B, -1), axis=1
    )
    np.testing.assert_allclose(
        np.asarray(loss), np.asarray(loss_ref), rtol=1e-5, atol=1e-5
    )

    assert loss.shape == (B,)
    print("KERNEL_OK")
</pallas_src>

<mosaic_0001>
module attributes {stable_mosaic.version = 11 : i64} {
  func.func @_fused_loss_kernel(%arg0: i32, %arg1: i32, %arg2: memref<2x3xf32, #tpu.memory_space<smem>>, %arg3: memref<1x8x128xf32, #tpu.memory_space<vmem>>, %arg4: memref<1x8x128xf32, #tpu.memory_space<vmem>>, %arg5: memref<1x8x128xf32, #tpu.memory_space<vmem>>, %arg6: memref<8x128xf32, #tpu.memory_space<vmem>>) attributes {dimension_semantics = [#tpu.dimension_semantics<parallel>, #tpu.dimension_semantics<arbitrary>], iteration_bounds = array<i64: 2, 1>, scalar_prefetch = 1 : i64, scratch_operands = 1 : i64, tpu.core_type = #tpu.core_type<tc>, window_params = [{transform_indices = @transform_0, window_bounds = array<i64: 1, 8, 128>}, {transform_indices = @transform_1, window_bounds = array<i64: 1, 8, 128>}, {transform_indices = @transform_2, window_bounds = array<i64: 1, 8, 128>}]} {
    %c0_i32 = arith.constant 0 : i32
    %0 = arith.cmpi eq, %arg1, %c0_i32 : i32
    %1 = arith.extui %0 : i1 to i32
    %c0_i32_0 = arith.constant 0 : i32
    %2 = arith.cmpi ne, %1, %c0_i32_0 : i32
    scf.if %2 {
      %cst_13 = arith.constant 0.000000e+00 : f32
      %25 = vector.broadcast %cst_13 : f32 to vector<8x128xf32>
      %c0_14 = arith.constant 0 : index
      %c0_15 = arith.constant 0 : index
      %26 = vector.load %arg6[%c0_14, %c0_15] : memref<8x128xf32, #tpu.memory_space<vmem>>, vector<8x128xf32>
      tpu.vector_store %arg6[%c0_14, %c0_15], %25 {strides = array<i32>} : memref<8x128xf32, #tpu.memory_space<vmem>>, vector<8x128xf32>,
    } else {
    }
    %3 = arith.index_cast %arg0 : i32 to index
    %c0 = arith.constant 0 : index
    %4 = memref.load %arg2[%3, %c0] : memref<2x3xf32, #tpu.memory_space<smem>>
    %5 = arith.index_cast %arg0 : i32 to index
    %c1 = arith.constant 1 : index
    %6 = memref.load %arg2[%5, %c1] : memref<2x3xf32, #tpu.memory_space<smem>>
    %c0_1 = arith.constant 0 : index
    %c0_2 = arith.constant 0 : index
    %c0_3 = arith.constant 0 : index
    %7 = vector.load %arg3[%c0_1, %c0_2, %c0_3] : memref<1x8x128xf32, #tpu.memory_space<vmem>>, vector<1x8x128xf32>
    %8 = vector.shape_cast %7 : vector<1x8x128xf32> to vector<8x128xf32>
    %c0_4 = arith.constant 0 : index
    %c0_5 = arith.constant 0 : index
    %c0_6 = arith.constant 0 : index
    %9 = vector.load %arg4[%c0_4, %c0_5, %c0_6] : memref<1x8x128xf32, #tpu.memory_space<vmem>>, vector<1x8x128xf32>
    %10 = vector.shape_cast %9 : vector<1x8x128xf32> to vector<8x128xf32>
    %11 = vector.broadcast %4 : f32 to vector<8x128xf32>
    %12 = arith.mulf %8, %11 : vector<8x128xf32>
    %13 = vector.broadcast %6 : f32 to vector<8x128xf32>
    %14 = arith.mulf %10, %13 : vector<8x128xf32>
    %15 = arith.addf %12, %14 : vector<8x128xf32>
    %c0_7 = arith.constant 0 : index
    %c0_8 = arith.constant 0 : index
    %16 = vector.load %arg6[%c0_7, %c0_8] : memref<8x128xf32, #tpu.memory_space<vmem>>, vector<8x128xf32>
    %17 = arith.mulf %15, %15 : vector<8x128xf32>
    %18 = vector.shape_cast %17 : vector<8x128xf32> to vector<1x8x128xf32>
    %cst = arith.constant dense<0.000000e+00> : vector<8x128xf32>
    %19 = vector.multi_reduction <add>, %18, %cst [0] : vector<1x8x128xf32> to vector<8x128xf32>
    %20 = arith.addf %16, %19 : vector<8x128xf32>
    %c0_9 = arith.constant 0 : index
    %c0_10 = arith.constant 0 : index
    %21 = vector.load %arg6[%c0_9, %c0_10] : memref<8x128xf32, #tpu.memory_space<vmem>>, vector<8x128xf32>
    tpu.vector_store %arg6[%c0_9, %c0_10], %20 {strides = array<i32>} : memref<8x128xf32, #tpu.memory_space<vmem>>, vector<8x128xf32>,
    %c0_i32_11 = arith.constant 0 : i32
    %22 = arith.cmpi eq, %arg1, %c0_i32_11 : i32
    %23 = arith.extui %22 : i1 to i32
    %c0_i32_12 = arith.constant 0 : i32
    %24 = arith.cmpi ne, %23, %c0_i32_12 : i32
    scf.if %24 {
      %25 = arith.index_cast %arg0 : i32 to index
      %c2 = arith.constant 2 : index
      %26 = memref.load %arg2[%25, %c2] : memref<2x3xf32, #tpu.memory_space<smem>>
      %c0_13 = arith.constant 0 : index
      %c0_14 = arith.constant 0 : index
      %27 = vector.load %arg6[%c0_13, %c0_14] : memref<8x128xf32, #tpu.memory_space<vmem>>, vector<8x128xf32>
      %28 = vector.shape_cast %27 : vector<8x128xf32> to vector<1x8x128xf32>
      %cst_15 = arith.constant dense<0.000000e+00> : vector<1xf32>
      %29 = vector.multi_reduction <add>, %28, %cst_15 [1, 2] : vector<1x8x128xf32> to vector<1xf32>
      %30 = vector.shape_cast %29 : vector<1xf32> to vector<1x1x1xf32>
      %31 = vector.extract %30[0, 0, 0] : f32 from vector<1x1x1xf32>
      %32 = arith.mulf %26, %31 : f32
      %33 = vector.broadcast %32 : f32 to vector<8x128xf32>
      %c0_16 = arith.constant 0 : index
      %c0_17 = arith.constant 0 : index
      %c0_18 = arith.constant 0 : index
      %34 = vector.load %arg5[%c0_16, %c0_17, %c0_18] : memref<1x8x128xf32, #tpu.memory_space<vmem>>, vector<1x8x128xf32>
      %35 = vector.shape_cast %34 : vector<1x8x128xf32> to vector<8x128xf32>
      %36 = vector.shape_cast %33 : vector<8x128xf32> to vector<1x8x128xf32>
      tpu.vector_store %arg5[%c0_16, %c0_17, %c0_18], %36 {strides = array<i32>} : memref<1x8x128xf32, #tpu.memory_space<vmem>>, vector<1x8x128xf32>,
    } else {
    }
    return
  }
  func.func @transform_0(%arg0: i32, %arg1: i32, %arg2: memref<2x3xf32, #tpu.memory_space<smem>>) -> (i32, i32, i32) {
    %c0_i32 = arith.constant 0 : i32
    %c0_i32_0 = arith.constant 0 : i32
    return %arg0, %arg1, %c0_i32 : i32, i32, i32
  }
  func.func @transform_1(%arg0: i32, %arg1: i32, %arg2: memref<2x3xf32, #tpu.memory_space<smem>>) -> (i32, i32, i32) {
    %c0_i32 = arith.constant 0 : i32
    %c0_i32_0 = arith.constant 0 : i32
    return %arg0, %arg1, %c0_i32 : i32, i32, i32
  }
  func.func @transform_2(%arg0: i32, %arg1: i32, %arg2: memref<2x3xf32, #tpu.memory_space<smem>>) -> (i32, i32, i32) {
    %c0_i32 = arith.constant 0 : i32
    %c0_i32_0 = arith.constant 0 : i32
    %c0_i32_1 = arith.constant 0 : i32
    return %arg0, %c0_i32, %c0_i32_0 : i32, i32, i32
  }
}

</mosaic_0001>

<llo_original>
// kernel: standard_diffusion_loss.1
$region0: #{standard_diffusion_loss.1}
  #allocation0 [shape = 'u32[]', space=smem, size = 0x4, offset = 0x4, fixed_abs, tag = 'smem constant byte address 0x4 - core index']
  #allocation1 [shape = 'u32[144,128]{1,0:T(1,128)}', space=vmem, size = 0x12000, scoped, tag = 'internal scratch']
  #allocation2 [shape = 'f32[8,128]{1,0:T(8,128)}', space=vmem, size = 0x1000, scoped, tag = 'scratch operand']
  #allocation3 [shape = 's32[1]{0}', space=sflag, size = 0x4, scoped, tag = 'scoped memory for standard_diffusion_loss.1']
  #allocation4 [shape = 'u8[1024]{0}', space=smem, size = 0x400, scoped, tag = 'prefetched SMEM operand 0']
  %s0 = inlined_call_operand.vmem [shape: f32[2,3], index: 0, kind: input, shape index: {}]
  %s1 = inlined_call_operand.vmem [shape: f32[2,8,128], index: 1, kind: input, shape index: {}]
  %s2 = inlined_call_operand.vmem [shape: f32[2,8,128], index: 2, kind: input, shape index: {}]
  %s3 = inlined_call_operand.vmem [shape: f32[2,8,128], index: 3, kind: output, shape index: {}]
  %s4 = sld [smem:[#allocation0]]
  $region49: #{standard_diffusion_loss.1} parent=0
    _
  %s6 = ssub.s32 1, %s4
  %s7 = scalar_select 0, %s6, %s4
  %s8 = sshll.u32 %s0, 4
  %s9 = int_to_ptr.vmem [resolvable:$true] %s8
  %11 = dma.vmem_to_smem %s9, 32, [#allocation4], [#allocation3]
  %12 = dma.done [#allocation3], 32
  %13 = sfence
  loop: start=0, step=1, limit=4
  $region2: #{standard_diffusion_loss.1} parent=0 // loop_pre_header
    _
  $region3: #{standard_diffusion_loss.1} parent=0 // loop_header
    %s15 = sphi 0, %s19
    %p16 = scmp.ge.s32.totalorder %s15, 4
    %s22 = sphi 0, %s34
    %s23 = sphi 0, %s30
    %s24 = sphi 0, %s22
    %s25 = sphi 0, %s23
    %s26 = sphi 0, %s24
    %s27 = sphi 0, %s25
    %s39 = sphi 0, %s41
    %s42 = sphi 0, %s39
    %s43 = sphi 0, %s42
    %s59 = sphi 0, %s43
    %s67 = sphi 0, %s69
    %s70 = sphi 0, %s67
    %s71 = sphi 0, %s70
    %s87 = sphi 0, %s71
    %s93 = sphi 0, %s95
    %s96 = sphi 0, %s93
    %s97 = sphi 0, %s96
    %s113 = sphi 0, %s97
  $region4: #{standard_diffusion_loss.1} parent=0 // loop_header_branch
    %18 = sbr.rel (%p16) target = $region8
  $region5: #{standard_diffusion_loss.1} parent=0 // loop_body
    %s20 = ssub.s32 %s15, 1
    %s21 = ssub.s32 %s15, 2
    %s28 = sadd.s32 1, %s23
    %p29 = scmp.ge.s32.totalorder %s28, 1
    %s30 = scalar_select %p29, 0, %s28
    %s31 = sadd.s32 1, %s22
    %s32 = scalar_select %p29, %s31, %s22
    %p33 = scmp.ge.s32.totalorder %s32, 2
    %s34 = scalar_select %p33, 0, %s32
    %s35 = ssub.s32 %s22, %s34
    %s36 = ssub.s32 %s23, %s30
    %s37 = sor.u32 %s35, %s36
    %p38 = scmp.eq.s32.totalorder %s37, 0
    %s40 = sadd.s32 %s39, 1
    %s41 = scalar_select %p38, %s39, %s40
    %p44 = pneg %p38
    %p45 = scmp.eq.s32.totalorder %s15, 1
    %p46 = por %p44, %p45
    %p47 = scmp.ne.s32.totalorder %s39, %s42
    %p48 = scmp.eq.s32.totalorder %s15, 0
    %p49 = por %p47, %p48
    %p50 = scmp.ne.s32.totalorder %s39, %s42
    %p51 = scmp.eq.s32.totalorder %s20, 1
    %p52 = por %p50, %p51
    %p53 = scmp.ne.s32.totalorder %s42, %s43
    %p54 = scmp.eq.s32.totalorder %s20, 0
    %p55 = por %p53, %p54
    %p56 = scmp.ne.s32.totalorder %s42, %s43
    %p57 = scmp.eq.s32.totalorder %s21, 1
    %p58 = por %p56, %p57
    %p60 = scmp.ne.s32.totalorder %s43, %s59
    %p61 = scmp.eq.s32.totalorder %s21, 0
    %p62 = por %p60, %p61
    %s63 = ssub.s32 %s22, %s34
    %s64 = ssub.s32 %s23, %s30
    %s65 = sor.u32 %s63, %s64
    %p66 = scmp.eq.s32.totalorder %s65, 0
    %s68 = sadd.s32 %s67, 1
    %s69 = scalar_select %p66, %s67, %s68
    %p72 = pneg %p66
    %p73 = scmp.eq.s32.totalorder %s15, 1
    %p74 = por %p72, %p73
    %p75 = scmp.ne.s32.totalorder %s67, %s70
    %p76 = scmp.eq.s32.totalorder %s15, 0
    %p77 = por %p75, %p76
    %p78 = scmp.ne.s32.totalorder %s67, %s70
    %p79 = scmp.eq.s32.totalorder %s20, 1
    %p80 = por %p78, %p79
    %p81 = scmp.ne.s32.totalorder %s70, %s71
    %p82 = scmp.eq.s32.totalorder %s20, 0
    %p83 = por %p81, %p82
    %p84 = scmp.ne.s32.totalorder %s70, %s71
    %p85 = scmp.eq.s32.totalorder %s21, 1
    %p86 = por %p84, %p85
    %p88 = scmp.ne.s32.totalorder %s71, %s87
    %p89 = scmp.eq.s32.totalorder %s21, 0
    %p90 = por %p88, %p89
    %s91 = ssub.s32 %s22, %s34
    %p92 = scmp.eq.s32.totalorder %s91, 0
    %s94 = sadd.s32 %s93, 1
    %s95 = scalar_select %p92, %s93, %s94
    %p98 = pneg %p92
    %p99 = scmp.eq.s32.totalorder %s15, 1
    %p100 = por %p98, %p99
    %p101 = scmp.ne.s32.totalorder %s93, %s96
    %p102 = scmp.eq.s32.totalorder %s15, 0
    %p103 = por %p101, %p102
    %p104 = scmp.ne.s32.totalorder %s93, %s96
    %p105 = scmp.eq.s32.totalorder %s20, 1
    %p106 = por %p104, %p105
    %p107 = scmp.ne.s32.totalorder %s96, %s97
    %p108 = scmp.eq.s32.totalorder %s20, 0
    %p109 = por %p107, %p108
    %p110 = scmp.ne.s32.totalorder %s96, %s97
    %p111 = scmp.eq.s32.totalorder %s21, 1
    %p112 = por %p110, %p111
    %p114 = scmp.ne.s32.totalorder %s97, %s113
    %p115 = scmp.eq.s32.totalorder %s21, 0
    %p116 = por %p114, %p115
    %p117 = scmp.le.s32.totalorder 1, %s15
    %p118 = scmp.lt.s32.totalorder %s15, 3
    %p119 = pnand %p117, %p118
    %p120 = pneg %p119
    // Predicated region
    $region9: #{standard_diffusion_loss.1} parent=5 // pred_check
      _
    $region10: #{standard_diffusion_loss.1} parent=5 // pred_check_branch
      %122 = sbr.rel (%p119) target = $region12
    $region11: #{standard_diffusion_loss.1} parent=5 // pred_region
      %s123 = ssub.s32 %s15, 1
    $region12: #{standard_diffusion_loss.1} parent=5 // pred_fallthru
      _
    %p124 = scmp.lt.s32.totalorder %s15, 2
    // Predicated region
    $region13: #{standard_diffusion_loss.1} parent=5 // pred_check
      %p125 = pneg %p124
    $region14: #{standard_diffusion_loss.1} parent=5 // pred_check_branch
      %127 = sbr.rel (%p125) target = $region16
    $region15: #{standard_diffusion_loss.1} parent=5 // pred_region
      // Predicated region
      $region17: #{standard_diffusion_loss.1} parent=15 // pred_check
        %p128 = pneg %p49
      $region18: #{standard_diffusion_loss.1} parent=15 // pred_check_branch
        %130 = sbr.rel (%p128) target = $region20
      $region19: #{standard_diffusion_loss.1} parent=15 // pred_region
        %p131 = scmp.lt.s32.totalorder %s22, 1
        %s132 = scalar_select %p131, %s22, 1
        %p133 = scmp.lt.s32.totalorder %s23, 0
        %s134 = scalar_select %p133, %s23, 0
        %s135 = sadd.s32 %s134, %s132
        %s136 = smul.addr %s135, 8
        %s137 = scalar_lea.vmem %s1, %s136
      $region20: #{standard_diffusion_loss.1} parent=15 // pred_fallthru
        _
      // Predicated region
      $region21: #{standard_diffusion_loss.1} parent=15 // pred_check
        %p138 = pneg %p77
      $region22: #{standard_diffusion_loss.1} parent=15 // pred_check_branch
        %140 = sbr.rel (%p138) target = $region24
      $region23: #{standard_diffusion_loss.1} parent=15 // pred_region
        %p141 = scmp.lt.s32.totalorder %s22, 1
        %s142 = scalar_select %p141, %s22, 1
        %p143 = scmp.lt.s32.totalorder %s23, 0
        %s144 = scalar_select %p143, %s23, 0
        %s145 = sadd.s32 %s144, %s142
        %s146 = smul.addr %s145, 8
        %s147 = scalar_lea.vmem %s2, %s146
      $region24: #{standard_diffusion_loss.1} parent=15 // pred_fallthru
        _
    $region16: #{standard_diffusion_loss.1} parent=5 // pred_fallthru
      _
    %p148 = scmp.le.s32.totalorder 1, %s15
    %p149 = scmp.lt.s32.totalorder %s15, 3
    %p150 = pnand %p148, %p149
    %p151 = pneg %p150
    // Predicated region
    $region25: #{standard_diffusion_loss.1} parent=5 // pred_check
      _
    $region26: #{standard_diffusion_loss.1} parent=5 // pred_check_branch
      %153 = sbr.rel (%p150) target = $region28
    $region27: #{standard_diffusion_loss.1} parent=5 // pred_region
      %s154 = ssub.s32 %s15, 1
      %p155 = scmp.lt.s32.totalorder %s24, 1
      %s156 = scalar_select %p155, %s24, 1
      %p157 = scmp.lt.s32.totalorder %s25, 0
      %s158 = scalar_select %p157, %s25, 0
      %s159 = sadd.s32 %s158, %s156
      %s160 = smul.addr %s159, 8
      %s161 = scalar_lea.vmem %s1, %s160
      %p162 = pneg %p55
      %p163 = pneg %p52
      %p164 = scmp.lt.s32.totalorder %s24, 1
      %s165 = scalar_select %p164, %s24, 1
      %p166 = scmp.lt.s32.totalorder %s25, 0
      %s167 = scalar_select %p166, %s25, 0
      %s168 = sadd.s32 %s167, %s165
      %s169 = smul.addr %s168, 8
      %s170 = scalar_lea.vmem %s2, %s169
      %p171 = pneg %p83
      %p172 = pneg %p80
      %p173 = pneg %p109
      %p174 = pneg %p106
      %p175 = scmp.lt.s32.totalorder %s24, 1
      %s176 = scalar_select %p175, %s24, 1
      %s177 = smul.addr %s176, 8
      %s178 = scalar_lea.vmem %s3, %s177
      %p179 = scmp.lt.s32.totalorder %s24, 1
      %s180 = scalar_select %p179, %s24, 1
      %p181 = scmp.lt.s32.totalorder %s25, 0
      %s182 = scalar_select %p181, %s25, 0
      %s183 = sadd.s32 %s182, %s180
      %s184 = smul.addr %s183, 8
      %s185 = scalar_lea.vmem %s1, %s184
      %p186 = scmp.lt.s32.totalorder %s24, 1
      %s187 = scalar_select %p186, %s24, 1
      %p188 = scmp.lt.s32.totalorder %s25, 0
      %s189 = scalar_select %p188, %s25, 0
      %s190 = sadd.s32 %s189, %s187
      %s191 = smul.addr %s190, 8
      %s192 = scalar_lea.vmem %s2, %s191
      %p193 = scmp.lt.s32.totalorder %s24, 1
      %s194 = scalar_select %p193, %s24, 1
      %s195 = smul.addr %s194, 8
      %s196 = scalar_lea.vmem %s3, %s195
      %p197 = scmp.eq.s32.totalorder %s25, 0
      // Predicated region
      $region29: #{standard_diffusion_loss.1} parent=27 // pred_check
        %p198 = pneg %p197
      $region30: #{standard_diffusion_loss.1} parent=27 // pred_check_branch
        %200 = sbr.rel (%p198) target = $region32
      $region31: #{standard_diffusion_loss.1} parent=27 // pred_region
        %201 = vst [vmem:[#allocation2] sm:$0xff] 0.0
      $region32: #{standard_diffusion_loss.1} parent=27 // pred_fallthru
        _
      %s202 = smul.u32 %s24, 128
      %s203 = sld [smem:[#allocation4 + %s202]]
      %s204 = sadd.s32 %s202, 1
      %s205 = sld [smem:[#allocation4 + %s204]]
      %v206 = vld [vmem:[%s185] sm:$0xff]
      %v207 = vld [vmem:[%s192] sm:$0xff]
      %v208 = vstv %s203
      %v209 = vmul.f32 %v206, %v208
      %v210 = vstv %s205
      %v211 = vmul.f32 %v207, %v210
      %v212 = vadd.f32 %v209, %v211
      %v213 = vld [vmem:[#allocation2] sm:$0xff]
      %v214 = vmul.f32 %v212, %v212
      %v215 = vadd.f32 %v214, 0.0
      %v216 = vadd.f32 %v213, %v215
      %217 = vst [vmem:[#allocation2] sm:$0xff] %v216
      // Predicated region
      $region33: #{standard_diffusion_loss.1} parent=27 // pred_check
        %p218 = pneg %p197
      $region34: #{standard_diffusion_loss.1} parent=27 // pred_check_branch
        %220 = sbr.rel (%p218) target = $region36
      $region35: #{standard_diffusion_loss.1} parent=27 // pred_region
        %s221 = sadd.s32 %s202, 2
        %s222 = sld [smem:[#allocation4 + %s221]]
        %v223 = vld [vmem:[#allocation2] sm:$0xff]
        %224 = vadd.xlane.f32.xlu0 %v223
        %v225 = vpop.xlane.xlu0 %224
        %v226 = vrot.slane %v225, 4
        %v227 = vadd.f32 %v225, %v226
        %v228 = vrot.slane %v227, 2
        %v229 = vadd.f32 %v227, %v228
        %v230 = vrot.slane %v229, 1
        %v231 = vadd.f32 %v229, %v230
        %s232 = vtos %v231
        %s233 = smul.f32 %s222, %s232
        %v234 = vstv %s233
        %235 = vst [vmem:[%s196] sm:$0xff] %v234
      $region36: #{standard_diffusion_loss.1} parent=27 // pred_fallthru
        _
      %p236 = scmp.lt.s32.totalorder %s24, 1
      %s237 = scalar_select %p236, %s24, 1
      %s238 = smul.addr %s237, 8
      %s239 = scalar_lea.vmem %s3, %s238
      // Predicated region
      $region37: #{standard_diffusion_loss.1} parent=27 // pred_check
        %p240 = pneg %p106
      $region38: #{standard_diffusion_loss.1} parent=27 // pred_check_branch
        %242 = sbr.rel (%p240) target = $region40
      $region39: #{standard_diffusion_loss.1} parent=27 // pred_region
        _
      $region40: #{standard_diffusion_loss.1} parent=27 // pred_fallthru
        _
    $region28: #{standard_diffusion_loss.1} parent=5 // pred_fallthru
      _
    %p243 = scmp.le.s32.totalorder 2, %s15
    // Predicated region
    $region41: #{standard_diffusion_loss.1} parent=5 // pred_check
      %p244 = pneg %p243
    $region42: #{standard_diffusion_loss.1} parent=5 // pred_check_branch
      %246 = sbr.rel (%p244) target = $region44
    $region43: #{standard_diffusion_loss.1} parent=5 // pred_region
      %s247 = ssub.s32 %s15, 2
      // Predicated region
      $region45: #{standard_diffusion_loss.1} parent=43 // pred_check
        %p248 = pneg %p112
      $region46: #{standard_diffusion_loss.1} parent=43 // pred_check_branch
        %250 = sbr.rel (%p248) target = $region48
      $region47: #{standard_diffusion_loss.1} parent=43 // pred_region
        %p251 = scmp.lt.s32.totalorder %s26, 1
        %s252 = scalar_select %p251, %s26, 1
        %s253 = smul.addr %s252, 8
        %s254 = scalar_lea.vmem %s3, %s253
      $region48: #{standard_diffusion_loss.1} parent=43 // pred_fallthru
        _
    $region44: #{standard_diffusion_loss.1} parent=5 // pred_fallthru
      _
  $region6: #{standard_diffusion_loss.1} parent=0 // loop_footer
    %s19 = sadd.s32 1, %s15
  $region7: #{standard_diffusion_loss.1} parent=0 // loop_footer_branch
    %14 = sbr.rel target = $region3
  $region8: #{standard_diffusion_loss.1} parent=0 // loop_exit
    _

</llo_original>
